<compile_context>
chip_gen: v5e
topology: v5e:2x2
jax: 0.10.0
libtpu: 0.0.40
codegen_flags: <defaults>
</compile_context>

<pallas_src>
import functools

import jax
import jax.numpy as jnp
import numpy as np
from jax.experimental import pallas as pl
from jax.experimental.pallas import tpu as pltpu


def _round_up(x, m):
    return (x + m - 1) // m * m


# --------------------------------------------------------------------------
# Fused Pallas kernel: 3 x (3x3 'same' conv + folded BN), ReLUs and residual,
# all on a (C, PF) flat-padded-spatial layout.
# --------------------------------------------------------------------------
def _make_fused_kernel(C, PF, H, W):
    Wp = W + 2

    def lane_shift(v, s):
        # Returns w with w[:, p] = v[:, p + s]  (a lane rotation).
        # Wrapped-around lanes only ever land in halo positions (|s| <= Wp+1 < first
        # valid flat index = Wp+1), never at a valid output pixel, so no masking here.
        if s == 0:
            return v
        return jnp.concatenate([v[:, s:], v[:, :s]], axis=1)

    def kernel(x_ref, w_ref, scale_ref, bias_ref, mask_ref, out_ref):
        mask = mask_ref[...]                      # (1, PF): 1.0 at real pixels, 0 at halo/tail

        def conv_bn(act, layer):
            # im2col: the 9 stencil taps are 9 uniform lane shifts of the flat (C, PF)
            # activation.  Stack them (sublane-tile aligned concat) into one (9C, PF)
            # slab and do a SINGLE MXU matmul per layer (K = 9*C) in bf16, f32 accum.
            taps = []
            for dy in range(3):
                for dx in range(3):
                    taps.append(lane_shift(act, (dy - 1) * Wp + (dx - 1)))
            slab = jnp.concatenate(taps, axis=0).astype(jnp.bfloat16)     # (9C, PF)
            y = jnp.dot(w_ref[layer], slab,
                        preferred_element_type=jnp.float32)               # (C, PF) f32
            return y * scale_ref[layer] + bias_ref[layer]                 # folded BN

        x = x_ref[0]                                      # (C, PF) f32, halo already zero
        x0 = jnp.maximum(conv_bn(x, 0), 0.0) * mask       # conv0 + BN + ReLU   (identity)
        y1 = jnp.maximum(conv_bn(x0, 1), 0.0) * mask      # conv1 + BN + ReLU
        y2 = conv_bn(y1, 2) + x0                          # conv2 + BN + identity
        out_ref[0] = jnp.maximum(y2, 0.0).astype(out_ref.dtype)   # lane-dense store

    return kernel


# --------------------------------------------------------------------------
# Parameter construction / packing.
# --------------------------------------------------------------------------
def _fold_bn(gamma, beta, mean, var, eps):
    scale = gamma / jnp.sqrt(var + eps)
    bias = beta - mean * scale
    return scale, bias


def init_params(key, inplanes, planes, eps=1e-3):
    """Deterministic synthetic params mirroring the PyTorch module's shapes."""
    ks = jax.random.split(key, 12)
    params = {}
    chans = [(inplanes, planes), (planes, planes), (planes, planes)]
    for i, (cin, cout) in enumerate(chans):
        w = jax.random.normal(ks[4 * i + 0], (cout, cin, 3, 3), jnp.float32) * 0.1
        gamma = 0.5 + jax.random.uniform(ks[4 * i + 1], (cout,), jnp.float32)
        beta = jax.random.normal(ks[4 * i + 2], (cout,), jnp.float32) * 0.1
        mean = jax.random.normal(ks[4 * i + 3], (cout,), jnp.float32) * 0.1
        var = 0.5 + jax.random.uniform(jax.random.fold_in(ks[4 * i + 3], 1),
                                       (cout,), jnp.float32)
        s, b = _fold_bn(gamma, beta, mean, var, eps)
        params[f"w{i}"] = w          # (cout, cin, 3, 3)  PyTorch OIHW
        params[f"s{i}"] = s          # (cout,)
        params[f"b{i}"] = b          # (cout,)
    return params


def prepare_kernel_params(params):
    """Pack weights / folded BN into the fused kernel's layout (done once, outside jit).

    w_all[l, co, (dy*3+dx)*C + ci] = W_l[co, ci, dy, dx]   (bf16, zero-padded channels)
    s_all/b_all: (3, C, 1) f32 folded BN scale/bias (padded out-channels: scale=1, bias=0)
    """
    couts = [params[f"w{i}"].shape[0] for i in range(3)]
    cins = [params[f"w{i}"].shape[1] for i in range(3)]
    C = _round_up(max(couts + cins), 8)
    ws, ss, bs = [], [], []
    for i in range(3):
        w = params[f"w{i}"]
        cout, cin = w.shape[:2]
        wp = jnp.pad(w, ((0, C - cout), (0, C - cin), (0, 0), (0, 0)))    # (C, C, 3, 3)
        ws.append(jnp.transpose(wp, (0, 2, 3, 1)).reshape(C, 9 * C))      # (C, 9C)
        ss.append(jnp.pad(params[f"s{i}"], (0, C - cout),
                          constant_values=1.0).reshape(C, 1))
        bs.append(jnp.pad(params[f"b{i}"], (0, C - cout)).reshape(C, 1))
    return {
        "w_all": jnp.stack(ws).astype(jnp.bfloat16),     # (3, C, 9C)
        "s_all": jnp.stack(ss).astype(jnp.float32),      # (3, C, 1)
        "b_all": jnp.stack(bs).astype(jnp.float32),      # (3, C, 1)
    }


# --------------------------------------------------------------------------
# Forward pass of Dense2DBasicBlockV (stride=1).  Input/output: NCHW.
# --------------------------------------------------------------------------
@functools.partial(jax.jit, static_argnames=("planes",))
def dense2d_basic_block_v(x_nchw, kparams, planes):
    N, Cin, H, W = x_nchw.shape
    C = kparams["w_all"].shape[1]
    P = (H + 2) * (W + 2)
    PF = _round_up(P, 128)          # flat spatial axis padded to full lane tiles

    # One tiny host-side prep op for the whole fused block (not one pad per conv):
    # zero halo + channel pad + flatten spatial + pad flat axis to a lane multiple.
    xp = jnp.pad(x_nchw, ((0, 0), (0, C - Cin), (1, 1), (1, 1)))     # (N, C, H+2, W+2)
    x_flat = jnp.pad(xp.reshape(N, C, P), ((0, 0), (0, 0), (0, PF - P)))  # (N, C, PF)

    # Interior mask over the flat padded axis (constant, built at trace time).
    mask_np = np.zeros((1, PF), np.float32)
    m2 = np.zeros((H + 2, W + 2), np.float32)
    m2[1:H + 1, 1:W + 1] = 1.0
    mask_np[0, :P] = m2.reshape(-1)
    mask = jnp.asarray(mask_np)

    kernel = _make_fused_kernel(C, PF, H, W)
    out_flat = pl.pallas_call(
        kernel,
        out_shape=jax.ShapeDtypeStruct((N, C, PF), jnp.float32),
        grid_spec=pltpu.PrefetchScalarGridSpec(
            num_scalar_prefetch=0,
            grid=(N,),
            in_specs=[
                pl.BlockSpec((1, C, PF), lambda n: (n, 0, 0)),       # x (per image)
                pl.BlockSpec((3, C, 9 * C), lambda n: (0, 0, 0)),    # all 3 conv weights
                pl.BlockSpec((3, C, 1), lambda n: (0, 0, 0)),        # BN scales
                pl.BlockSpec((3, C, 1), lambda n: (0, 0, 0)),        # BN biases
                pl.BlockSpec((1, PF), lambda n: (0, 0)),             # interior mask
            ],
            out_specs=pl.BlockSpec((1, C, PF), lambda n: (n, 0, 0)),
        ),
        compiler_params=pltpu.CompilerParams(
            dimension_semantics=("parallel",)),                      # both v7x TCs busy
    )(x_flat, kparams["w_all"], kparams["s_all"], kparams["b_all"], mask)

    # Strip channel / halo / lane-tail padding (tiny host-side slice).
    out = out_flat[:, :planes, :P].reshape(N, planes, H + 2, W + 2)
    return out[:, :, 1:H + 1, 1:W + 1]


# --------------------------------------------------------------------------
# Pure-JAX reference (f32) for correctness checking.
# --------------------------------------------------------------------------
def _ref_forward(x_nchw, p):
    def conv_bn(x, w, s, b):
        y = jax.lax.conv_general_dilated(
            x, w, (1, 1), "SAME",
            dimension_numbers=("NCHW", "OIHW", "NCHW"))
        return y * s.reshape(1, -1, 1, 1) + b.reshape(1, -1, 1, 1)

    x0 = jnp.maximum(conv_bn(x_nchw, p["w0"], p["s0"], p["b0"]), 0.0)
    y1 = jnp.maximum(conv_bn(x0, p["w1"], p["s1"], p["b1"]), 0.0)
    y2 = conv_bn(y1, p["w2"], p["s2"], p["b2"]) + x0
    return jnp.maximum(y2, 0.0)


if __name__ == "__main__":
    key = jax.random.PRNGKey(0)
    k_x, k_p = jax.random.split(key)

    N, inplanes, planes, H, W = 2, 4, 8, 16, 16
    x = jax.random.normal(k_x, (N, inplanes, H, W), jnp.float32)
    params = init_params(k_p, inplanes, planes)
    kparams = prepare_kernel_params(params)

    out = jax.block_until_ready(dense2d_basic_block_v(x, kparams, planes))
    assert out.shape == (N, planes, H, W)

    ref = jax.block_until_ready(_ref_forward(x, params))
    # bf16 matmul operands (f32 accumulation/epilogue) -> loosened tolerance.
    np.testing.assert_allclose(np.asarray(out), np.asarray(ref),
                               rtol=5e-2, atol=5e-2)

    print("KERNEL_OK")
</pallas_src>

<mosaic_0001>
module attributes {stable_mosaic.version = 11 : i64} {
  func.func @kernel(%arg0: i32, %arg1: memref<1x8x384xf32, #tpu.memory_space<vmem>>, %arg2: memref<3x8x72xbf16, #tpu.memory_space<vmem>>, %arg3: memref<3x8x1xf32, #tpu.memory_space<vmem>>, %arg4: memref<3x8x1xf32, #tpu.memory_space<vmem>>, %arg5: memref<1x384xf32, #tpu.memory_space<vmem>>, %arg6: memref<1x8x384xf32, #tpu.memory_space<vmem>>) attributes {dimension_semantics = [#tpu.dimension_semantics<parallel>], iteration_bounds = array<i64: 2>, scalar_prefetch = 0 : i64, scratch_operands = 0 : i64, tpu.core_type = #tpu.core_type<tc>, window_params = [{transform_indices = @transform_0, window_bounds = array<i64: 1, 8, 384>}, {pipeline_mode = #tpu.pipeline_mode<synchronous>, transform_indices = @transform_1, window_bounds = array<i64: 3, 8, 72>}, {pipeline_mode = #tpu.pipeline_mode<synchronous>, transform_indices = @transform_2, window_bounds = array<i64: 3, 8, 1>}, {pipeline_mode = #tpu.pipeline_mode<synchronous>, transform_indices = @transform_3, window_bounds = array<i64: 3, 8, 1>}, {pipeline_mode = #tpu.pipeline_mode<synchronous>, transform_indices = @transform_4, window_bounds = array<i64: 1, 384>}, {transform_indices = @transform_5, window_bounds = array<i64: 1, 8, 384>}]} {
    %c0 = arith.constant 0 : index
    %c0_0 = arith.constant 0 : index
    %0 = vector.load %arg5[%c0, %c0_0] : memref<1x384xf32, #tpu.memory_space<vmem>>, vector<1x384xf32>
    %c0_1 = arith.constant 0 : index
    %c0_2 = arith.constant 0 : index
    %c0_3 = arith.constant 0 : index
    %1 = vector.load %arg1[%c0_1, %c0_2, %c0_3] : memref<1x8x384xf32, #tpu.memory_space<vmem>>, vector<1x8x384xf32>
    %2 = vector.shape_cast %1 : vector<1x8x384xf32> to vector<8x384xf32>
    %3 = vector.extract_strided_slice %2 {offsets = [0, 365], sizes = [8, 19], strides = [1, 1]} : vector<8x384xf32> to vector<8x19xf32>
    %4 = vector.extract_strided_slice %2 {offsets = [0, 0], sizes = [8, 365], strides = [1, 1]} : vector<8x384xf32> to vector<8x365xf32>
    %5 = tpu.concatenate %3, %4 in 1 : vector<8x19xf32>, vector<8x365xf32> -> vector<8x384xf32>
    %6 = vector.extract_strided_slice %2 {offsets = [0, 366], sizes = [8, 18], strides = [1, 1]} : vector<8x384xf32> to vector<8x18xf32>
    %7 = vector.extract_strided_slice %2 {offsets = [0, 0], sizes = [8, 366], strides = [1, 1]} : vector<8x384xf32> to vector<8x366xf32>
    %8 = tpu.concatenate %6, %7 in 1 : vector<8x18xf32>, vector<8x366xf32> -> vector<8x384xf32>
    %9 = vector.extract_strided_slice %2 {offsets = [0, 367], sizes = [8, 17], strides = [1, 1]} : vector<8x384xf32> to vector<8x17xf32>
    %10 = vector.extract_strided_slice %2 {offsets = [0, 0], sizes = [8, 367], strides = [1, 1]} : vector<8x384xf32> to vector<8x367xf32>
    %11 = tpu.concatenate %9, %10 in 1 : vector<8x17xf32>, vector<8x367xf32> -> vector<8x384xf32>
    %12 = vector.extract_strided_slice %2 {offsets = [0, 383], sizes = [8, 1], strides = [1, 1]} : vector<8x384xf32> to vector<8x1xf32>
    %13 = vector.extract_strided_slice %2 {offsets = [0, 0], sizes = [8, 383], strides = [1, 1]} : vector<8x384xf32> to vector<8x383xf32>
    %14 = tpu.concatenate %12, %13 in 1 : vector<8x1xf32>, vector<8x383xf32> -> vector<8x384xf32>
    %15 = vector.extract_strided_slice %2 {offsets = [0, 1], sizes = [8, 383], strides = [1, 1]} : vector<8x384xf32> to vector<8x383xf32>
    %16 = vector.extract_strided_slice %2 {offsets = [0, 0], sizes = [8, 1], strides = [1, 1]} : vector<8x384xf32> to vector<8x1xf32>
    %17 = tpu.concatenate %15, %16 in 1 : vector<8x383xf32>, vector<8x1xf32> -> vector<8x384xf32>
    %18 = vector.extract_strided_slice %2 {offsets = [0, 17], sizes = [8, 367], strides = [1, 1]} : vector<8x384xf32> to vector<8x367xf32>
    %19 = vector.extract_strided_slice %2 {offsets = [0, 0], sizes = [8, 17], strides = [1, 1]} : vector<8x384xf32> to vector<8x17xf32>
    %20 = tpu.concatenate %18, %19 in 1 : vector<8x367xf32>, vector<8x17xf32> -> vector<8x384xf32>
    %21 = vector.extract_strided_slice %2 {offsets = [0, 18], sizes = [8, 366], strides = [1, 1]} : vector<8x384xf32> to vector<8x366xf32>
    %22 = vector.extract_strided_slice %2 {offsets = [0, 0], sizes = [8, 18], strides = [1, 1]} : vector<8x384xf32> to vector<8x18xf32>
    %23 = tpu.concatenate %21, %22 in 1 : vector<8x366xf32>, vector<8x18xf32> -> vector<8x384xf32>
    %24 = vector.extract_strided_slice %2 {offsets = [0, 19], sizes = [8, 365], strides = [1, 1]} : vector<8x384xf32> to vector<8x365xf32>
    %25 = vector.extract_strided_slice %2 {offsets = [0, 0], sizes = [8, 19], strides = [1, 1]} : vector<8x384xf32> to vector<8x19xf32>
    %26 = tpu.concatenate %24, %25 in 1 : vector<8x365xf32>, vector<8x19xf32> -> vector<8x384xf32>
    %27 = tpu.concatenate %5, %8, %11, %14, %2, %17, %20, %23, %26 in 0 : vector<8x384xf32>, vector<8x384xf32>, vector<8x384xf32>, vector<8x384xf32>, vector<8x384xf32>, vector<8x384xf32>, vector<8x384xf32>, vector<8x384xf32>, vector<8x384xf32> -> vector<72x384xf32>
    %28 = arith.truncf %27 : vector<72x384xf32> to vector<72x384xbf16>
    %c0_4 = arith.constant 0 : index
    %c0_5 = arith.constant 0 : index
    %c0_6 = arith.constant 0 : index
    %29 = vector.load %arg2[%c0_4, %c0_5, %c0_6] : memref<3x8x72xbf16, #tpu.memory_space<vmem>>, vector<1x8x72xbf16>
    %30 = vector.shape_cast %29 : vector<1x8x72xbf16> to vector<8x72xbf16>
    %cst = arith.constant dense<0.000000e+00> : vector<8x384xf32>
    %31 = tpu.matmul %30, %28, %cst {dimension_numbers = #tpu.dot_dimension_numbers<[1], [0], [0], [1], [0, 0, 1, 1], [], []>} : vector<8x72xbf16>, vector<72x384xbf16>, vector<8x384xf32> -> vector<8x384xf32>
    %c0_7 = arith.constant 0 : index
    %c0_8 = arith.constant 0 : index
    %c0_9 = arith.constant 0 : index
    %32 = vector.load %arg3[%c0_7, %c0_8, %c0_9] : memref<3x8x1xf32, #tpu.memory_space<vmem>>, vector<1x8x1xf32>
    %33 = vector.shape_cast %32 : vector<1x8x1xf32> to vector<8x1xf32>
    %34 = vector.broadcast %33 : vector<8x1xf32> to vector<8x384xf32>
    %35 = arith.mulf %31, %34 : vector<8x384xf32>
    %c0_10 = arith.constant 0 : index
    %c0_11 = arith.constant 0 : index
    %c0_12 = arith.constant 0 : index
    %36 = vector.load %arg4[%c0_10, %c0_11, %c0_12] : memref<3x8x1xf32, #tpu.memory_space<vmem>>, vector<1x8x1xf32>
    %37 = vector.shape_cast %36 : vector<1x8x1xf32> to vector<8x1xf32>
    %38 = vector.broadcast %37 : vector<8x1xf32> to vector<8x384xf32>
    %39 = arith.addf %35, %38 : vector<8x384xf32>
    %cst_13 = arith.constant 0.000000e+00 : f32
    %40 = vector.broadcast %cst_13 : f32 to vector<8x384xf32>
    %41 = arith.maximumf %39, %40 : vector<8x384xf32>
    %42 = vector.broadcast %0 : vector<1x384xf32> to vector<8x384xf32>
    %43 = arith.mulf %41, %42 : vector<8x384xf32>
    %44 = vector.extract_strided_slice %43 {offsets = [0, 365], sizes = [8, 19], strides = [1, 1]} : vector<8x384xf32> to vector<8x19xf32>
    %45 = vector.extract_strided_slice %43 {offsets = [0, 0], sizes = [8, 365], strides = [1, 1]} : vector<8x384xf32> to vector<8x365xf32>
    %46 = tpu.concatenate %44, %45 in 1 : vector<8x19xf32>, vector<8x365xf32> -> vector<8x384xf32>
    %47 = vector.extract_strided_slice %43 {offsets = [0, 366], sizes = [8, 18], strides = [1, 1]} : vector<8x384xf32> to vector<8x18xf32>
    %48 = vector.extract_strided_slice %43 {offsets = [0, 0], sizes = [8, 366], strides = [1, 1]} : vector<8x384xf32> to vector<8x366xf32>
    %49 = tpu.concatenate %47, %48 in 1 : vector<8x18xf32>, vector<8x366xf32> -> vector<8x384xf32>
    %50 = vector.extract_strided_slice %43 {offsets = [0, 367], sizes = [8, 17], strides = [1, 1]} : vector<8x384xf32> to vector<8x17xf32>
    %51 = vector.extract_strided_slice %43 {offsets = [0, 0], sizes = [8, 367], strides = [1, 1]} : vector<8x384xf32> to vector<8x367xf32>
    %52 = tpu.concatenate %50, %51 in 1 : vector<8x17xf32>, vector<8x367xf32> -> vector<8x384xf32>
    %53 = vector.extract_strided_slice %43 {offsets = [0, 383], sizes = [8, 1], strides = [1, 1]} : vector<8x384xf32> to vector<8x1xf32>
    %54 = vector.extract_strided_slice %43 {offsets = [0, 0], sizes = [8, 383], strides = [1, 1]} : vector<8x384xf32> to vector<8x383xf32>
    %55 = tpu.concatenate %53, %54 in 1 : vector<8x1xf32>, vector<8x383xf32> -> vector<8x384xf32>
    %56 = vector.extract_strided_slice %43 {offsets = [0, 1], sizes = [8, 383], strides = [1, 1]} : vector<8x384xf32> to vector<8x383xf32>
    %57 = vector.extract_strided_slice %43 {offsets = [0, 0], sizes = [8, 1], strides = [1, 1]} : vector<8x384xf32> to vector<8x1xf32>
    %58 = tpu.concatenate %56, %57 in 1 : vector<8x383xf32>, vector<8x1xf32> -> vector<8x384xf32>
    %59 = vector.extract_strided_slice %43 {offsets = [0, 17], sizes = [8, 367], strides = [1, 1]} : vector<8x384xf32> to vector<8x367xf32>
    %60 = vector.extract_strided_slice %43 {offsets = [0, 0], sizes = [8, 17], strides = [1, 1]} : vector<8x384xf32> to vector<8x17xf32>
    %61 = tpu.concatenate %59, %60 in 1 : vector<8x367xf32>, vector<8x17xf32> -> vector<8x384xf32>
    %62 = vector.extract_strided_slice %43 {offsets = [0, 18], sizes = [8, 366], strides = [1, 1]} : vector<8x384xf32> to vector<8x366xf32>
    %63 = vector.extract_strided_slice %43 {offsets = [0, 0], sizes = [8, 18], strides = [1, 1]} : vector<8x384xf32> to vector<8x18xf32>
    %64 = tpu.concatenate %62, %63 in 1 : vector<8x366xf32>, vector<8x18xf32> -> vector<8x384xf32>
    %65 = vector.extract_strided_slice %43 {offsets = [0, 19], sizes = [8, 365], strides = [1, 1]} : vector<8x384xf32> to vector<8x365xf32>
    %66 = vector.extract_strided_slice %43 {offsets = [0, 0], sizes = [8, 19], strides = [1, 1]} : vector<8x384xf32> to vector<8x19xf32>
    %67 = tpu.concatenate %65, %66 in 1 : vector<8x365xf32>, vector<8x19xf32> -> vector<8x384xf32>
    %68 = tpu.concatenate %46, %49, %52, %55, %43, %58, %61, %64, %67 in 0 : vector<8x384xf32>, vector<8x384xf32>, vector<8x384xf32>, vector<8x384xf32>, vector<8x384xf32>, vector<8x384xf32>, vector<8x384xf32>, vector<8x384xf32>, vector<8x384xf32> -> vector<72x384xf32>
    %69 = arith.truncf %68 : vector<72x384xf32> to vector<72x384xbf16>
    %c1 = arith.constant 1 : index
    %c0_14 = arith.constant 0 : index
    %c0_15 = arith.constant 0 : index
    %70 = vector.load %arg2[%c1, %c0_14, %c0_15] : memref<3x8x72xbf16, #tpu.memory_space<vmem>>, vector<1x8x72xbf16>
    %71 = vector.shape_cast %70 : vector<1x8x72xbf16> to vector<8x72xbf16>
    %cst_16 = arith.constant dense<0.000000e+00> : vector<8x384xf32>
    %72 = tpu.matmul %71, %69, %cst_16 {dimension_numbers = #tpu.dot_dimension_numbers<[1], [0], [0], [1], [0, 0, 1, 1], [], []>} : vector<8x72xbf16>, vector<72x384xbf16>, vector<8x384xf32> -> vector<8x384xf32>
    %c1_17 = arith.constant 1 : index
    %c0_18 = arith.constant 0 : index
    %c0_19 = arith.constant 0 : index
    %73 = vector.load %arg3[%c1_17, %c0_18, %c0_19] : memref<3x8x1xf32, #tpu.memory_space<vmem>>, vector<1x8x1xf32>
    %74 = vector.shape_cast %73 : vector<1x8x1xf32> to vector<8x1xf32>
    %75 = vector.broadcast %74 : vector<8x1xf32> to vector<8x384xf32>
    %76 = arith.mulf %72, %75 : vector<8x384xf32>
    %c1_20 = arith.constant 1 : index
    %c0_21 = arith.constant 0 : index
    %c0_22 = arith.constant 0 : index
    %77 = vector.load %arg4[%c1_20, %c0_21, %c0_22] : memref<3x8x1xf32, #tpu.memory_space<vmem>>, vector<1x8x1xf32>
    %78 = vector.shape_cast %77 : vector<1x8x1xf32> to vector<8x1xf32>
    %79 = vector.broadcast %78 : vector<8x1xf32> to vector<8x384xf32>
    %80 = arith.addf %76, %79 : vector<8x384xf32>
    %cst_23 = arith.constant 0.000000e+00 : f32
    %81 = vector.broadcast %cst_23 : f32 to vector<8x384xf32>
    %82 = arith.maximumf %80, %81 : vector<8x384xf32>
    %83 = vector.broadcast %0 : vector<1x384xf32> to vector<8x384xf32>
    %84 = arith.mulf %82, %83 : vector<8x384xf32>
    %85 = vector.extract_strided_slice %84 {offsets = [0, 365], sizes = [8, 19], strides = [1, 1]} : vector<8x384xf32> to vector<8x19xf32>
    %86 = vector.extract_strided_slice %84 {offsets = [0, 0], sizes = [8, 365], strides = [1, 1]} : vector<8x384xf32> to vector<8x365xf32>
    %87 = tpu.concatenate %85, %86 in 1 : vector<8x19xf32>, vector<8x365xf32> -> vector<8x384xf32>
    %88 = vector.extract_strided_slice %84 {offsets = [0, 366], sizes = [8, 18], strides = [1, 1]} : vector<8x384xf32> to vector<8x18xf32>
    %89 = vector.extract_strided_slice %84 {offsets = [0, 0], sizes = [8, 366], strides = [1, 1]} : vector<8x384xf32> to vector<8x366xf32>
    %90 = tpu.concatenate %88, %89 in 1 : vector<8x18xf32>, vector<8x366xf32> -> vector<8x384xf32>
    %91 = vector.extract_strided_slice %84 {offsets = [0, 367], sizes = [8, 17], strides = [1, 1]} : vector<8x384xf32> to vector<8x17xf32>
    %92 = vector.extract_strided_slice %84 {offsets = [0, 0], sizes = [8, 367], strides = [1, 1]} : vector<8x384xf32> to vector<8x367xf32>
    %93 = tpu.concatenate %91, %92 in 1 : vector<8x17xf32>, vector<8x367xf32> -> vector<8x384xf32>
    %94 = vector.extract_strided_slice %84 {offsets = [0, 383], sizes = [8, 1], strides = [1, 1]} : vector<8x384xf32> to vector<8x1xf32>
    %95 = vector.extract_strided_slice %84 {offsets = [0, 0], sizes = [8, 383], strides = [1, 1]} : vector<8x384xf32> to vector<8x383xf32>
    %96 = tpu.concatenate %94, %95 in 1 : vector<8x1xf32>, vector<8x383xf32> -> vector<8x384xf32>
    %97 = vector.extract_strided_slice %84 {offsets = [0, 1], sizes = [8, 383], strides = [1, 1]} : vector<8x384xf32> to vector<8x383xf32>
    %98 = vector.extract_strided_slice %84 {offsets = [0, 0], sizes = [8, 1], strides = [1, 1]} : vector<8x384xf32> to vector<8x1xf32>
    %99 = tpu.concatenate %97, %98 in 1 : vector<8x383xf32>, vector<8x1xf32> -> vector<8x384xf32>
    %100 = vector.extract_strided_slice %84 {offsets = [0, 17], sizes = [8, 367], strides = [1, 1]} : vector<8x384xf32> to vector<8x367xf32>
    %101 = vector.extract_strided_slice %84 {offsets = [0, 0], sizes = [8, 17], strides = [1, 1]} : vector<8x384xf32> to vector<8x17xf32>
    %102 = tpu.concatenate %100, %101 in 1 : vector<8x367xf32>, vector<8x17xf32> -> vector<8x384xf32>
    %103 = vector.extract_strided_slice %84 {offsets = [0, 18], sizes = [8, 366], strides = [1, 1]} : vector<8x384xf32> to vector<8x366xf32>
    %104 = vector.extract_strided_slice %84 {offsets = [0, 0], sizes = [8, 18], strides = [1, 1]} : vector<8x384xf32> to vector<8x18xf32>
    %105 = tpu.concatenate %103, %104 in 1 : vector<8x366xf32>, vector<8x18xf32> -> vector<8x384xf32>
    %106 = vector.extract_strided_slice %84 {offsets = [0, 19], sizes = [8, 365], strides = [1, 1]} : vector<8x384xf32> to vector<8x365xf32>
    %107 = vector.extract_strided_slice %84 {offsets = [0, 0], sizes = [8, 19], strides = [1, 1]} : vector<8x384xf32> to vector<8x19xf32>
    %108 = tpu.concatenate %106, %107 in 1 : vector<8x365xf32>, vector<8x19xf32> -> vector<8x384xf32>
    %109 = tpu.concatenate %87, %90, %93, %96, %84, %99, %102, %105, %108 in 0 : vector<8x384xf32>, vector<8x384xf32>, vector<8x384xf32>, vector<8x384xf32>, vector<8x384xf32>, vector<8x384xf32>, vector<8x384xf32>, vector<8x384xf32>, vector<8x384xf32> -> vector<72x384xf32>
    %110 = arith.truncf %109 : vector<72x384xf32> to vector<72x384xbf16>
    %c2 = arith.constant 2 : index
    %c0_24 = arith.constant 0 : index
    %c0_25 = arith.constant 0 : index
    %111 = vector.load %arg2[%c2, %c0_24, %c0_25] : memref<3x8x72xbf16, #tpu.memory_space<vmem>>, vector<1x8x72xbf16>
    %112 = vector.shape_cast %111 : vector<1x8x72xbf16> to vector<8x72xbf16>
    %cst_26 = arith.constant dense<0.000000e+00> : vector<8x384xf32>
    %113 = tpu.matmul %112, %110, %cst_26 {dimension_numbers = #tpu.dot_dimension_numbers<[1], [0], [0], [1], [0, 0, 1, 1], [], []>} : vector<8x72xbf16>, vector<72x384xbf16>, vector<8x384xf32> -> vector<8x384xf32>
    %c2_27 = arith.constant 2 : index
    %c0_28 = arith.constant 0 : index
    %c0_29 = arith.constant 0 : index
    %114 = vector.load %arg3[%c2_27, %c0_28, %c0_29] : memref<3x8x1xf32, #tpu.memory_space<vmem>>, vector<1x8x1xf32>
    %115 = vector.shape_cast %114 : vector<1x8x1xf32> to vector<8x1xf32>
    %116 = vector.broadcast %115 : vector<8x1xf32> to vector<8x384xf32>
    %117 = arith.mulf %113, %116 : vector<8x384xf32>
    %c2_30 = arith.constant 2 : index
    %c0_31 = arith.constant 0 : index
    %c0_32 = arith.constant 0 : index
    %118 = vector.load %arg4[%c2_30, %c0_31, %c0_32] : memref<3x8x1xf32, #tpu.memory_space<vmem>>, vector<1x8x1xf32>
    %119 = vector.shape_cast %118 : vector<1x8x1xf32> to vector<8x1xf32>
    %120 = vector.broadcast %119 : vector<8x1xf32> to vector<8x384xf32>
    %121 = arith.addf %117, %120 : vector<8x384xf32>
    %122 = arith.addf %121, %43 : vector<8x384xf32>
    %cst_33 = arith.constant 0.000000e+00 : f32
    %123 = vector.broadcast %cst_33 : f32 to vector<8x384xf32>
    %124 = arith.maximumf %122, %123 : vector<8x384xf32>
    %c0_34 = arith.constant 0 : index
    %c0_35 = arith.constant 0 : index
    %c0_36 = arith.constant 0 : index
    %125 = vector.load %arg6[%c0_34, %c0_35, %c0_36] : memref<1x8x384xf32, #tpu.memory_space<vmem>>, vector<1x8x384xf32>
    %126 = vector.shape_cast %125 : vector<1x8x384xf32> to vector<8x384xf32>
    %127 = vector.shape_cast %124 : vector<8x384xf32> to vector<1x8x384xf32>
    tpu.vector_store %arg6[%c0_34, %c0_35, %c0_36], %127 {strides = array<i32>} : memref<1x8x384xf32, #tpu.memory_space<vmem>>, vector<1x8x384xf32>,
    return
  }
  func.func @transform_0(%arg0: i32) -> (i32, i32, i32) {
    %c0_i32 = arith.constant 0 : i32
    %c0_i32_0 = arith.constant 0 : i32
    %c0_i32_1 = arith.constant 0 : i32
    return %arg0, %c0_i32, %c0_i32_0 : i32, i32, i32
  }
  func.func @transform_1(%arg0: i32) -> (i32, i32, i32) {
    %c0_i32 = arith.constant 0 : i32
    %c0_i32_0 = arith.constant 0 : i32
    %c0_i32_1 = arith.constant 0 : i32
    %c0_i32_2 = arith.constant 0 : i32
    return %c0_i32, %c0_i32_0, %c0_i32_1 : i32, i32, i32
  }
  func.func @transform_2(%arg0: i32) -> (i32, i32, i32) {
    %c0_i32 = arith.constant 0 : i32
    %c0_i32_0 = arith.constant 0 : i32
    %c0_i32_1 = arith.constant 0 : i32
    %c0_i32_2 = arith.constant 0 : i32
    return %c0_i32, %c0_i32_0, %c0_i32_1 : i32, i32, i32
  }
  func.func @transform_3(%arg0: i32) -> (i32, i32, i32) {
    %c0_i32 = arith.constant 0 : i32
    %c0_i32_0 = arith.constant 0 : i32
    %c0_i32_1 = arith.constant 0 : i32
    %c0_i32_2 = arith.constant 0 : i32
    return %c0_i32, %c0_i32_0, %c0_i32_1 : i32, i32, i32
  }
  func.func @transform_4(%arg0: i32) -> (i32, i32) {
    %c0_i32 = arith.constant 0 : i32
    %c0_i32_0 = arith.constant 0 : i32
    %c0_i32_1 = arith.constant 0 : i32
    return %c0_i32, %c0_i32_0 : i32, i32
  }
  func.func @transform_5(%arg0: i32) -> (i32, i32, i32) {
    %c0_i32 = arith.constant 0 : i32
    %c0_i32_0 = arith.constant 0 : i32
    %c0_i32_1 = arith.constant 0 : i32
    return %arg0, %c0_i32, %c0_i32_0 : i32, i32, i32
  }
}

</mosaic_0001>

<llo_original>
// kernel: dense2d_basic_block_v.1
$region0: #{dense2d_basic_block_v.1}
  #allocation0 [shape = 'u32[]', space=smem, size = 0x4, offset = 0x4, fixed_abs, tag = 'smem constant byte address 0x4 - core index']
  #allocation1 [shape = 'u32[72,128]{1,0:T(1,128)}', space=vmem, size = 0x9000, scoped, tag = 'internal scratch']
  %s0 = inlined_call_operand.vmem [shape: f32[2,8,384], index: 0, kind: input, shape index: {}]
  %s1 = inlined_call_operand.vmem [shape: bf16[3,8,72], index: 1, kind: input, shape index: {}]
  %s2 = inlined_call_operand.vmem [shape: f32[3,8,1], index: 2, kind: input, shape index: {}]
  %s3 = inlined_call_operand.vmem [shape: f32[3,8,1], index: 3, kind: input, shape index: {}]
  %s4 = inlined_call_operand.vmem [shape: f32[1,384], index: 4, kind: input, shape index: {}]
  %s5 = inlined_call_operand.vmem [shape: f32[2,8,384], index: 5, kind: output, shape index: {}]
  %s6 = sld [smem:[#allocation0]]
  $region53: #{dense2d_basic_block_v.1} parent=0
    _
  %s8 = ssub.s32 1, %s6
  %s9 = scalar_select 0, %s8, %s6
  loop: start=0, step=1, limit=4
  $region2: #{dense2d_basic_block_v.1} parent=0 // loop_pre_header
    _
  $region3: #{dense2d_basic_block_v.1} parent=0 // loop_header
    %s11 = sphi 0, %s15
    %p12 = scmp.ge.s32.totalorder %s11, 4
    %s21 = sphi 0, %s23
    %s24 = sphi 0, %s21
    %s25 = sphi 0, %s24
    %s41 = sphi 0, %s25
    %s45 = sphi 0, %s45
    %s47 = sphi 0, %s45
    %s48 = sphi 0, %s47
    %s62 = sphi 0, %s48
    %s66 = sphi 0, %s66
    %s68 = sphi 0, %s66
    %s69 = sphi 0, %s68
    %s83 = sphi 0, %s69
    %s87 = sphi 0, %s87
    %s89 = sphi 0, %s87
    %s90 = sphi 0, %s89
    %s104 = sphi 0, %s90
    %s108 = sphi 0, %s108
    %s110 = sphi 0, %s108
    %s111 = sphi 0, %s110
    %s125 = sphi 0, %s111
    %s131 = sphi 0, %s133
    %s134 = sphi 0, %s131
    %s135 = sphi 0, %s134
    %s151 = sphi 0, %s135
  $region4: #{dense2d_basic_block_v.1} parent=0 // loop_header_branch
    %14 = sbr.rel (%p12) target = $region8
  $region5: #{dense2d_basic_block_v.1} parent=0 // loop_body
    %s16 = ssub.s32 %s11, 1
    %s17 = ssub.s32 %s11, 2
    %s18 = sadd.s32 %s11, 1
    %s19 = ssub.s32 %s11, %s18
    %p20 = scmp.eq.s32.totalorder %s19, 0
    %s22 = sadd.s32 %s21, 1
    %s23 = scalar_select %p20, %s21, %s22
    %p26 = pneg %p20
    %p27 = scmp.eq.s32.totalorder %s11, 1
    %p28 = por %p26, %p27
    %p29 = scmp.ne.s32.totalorder %s21, %s24
    %p30 = scmp.eq.s32.totalorder %s11, 0
    %p31 = por %p29, %p30
    %p32 = scmp.ne.s32.totalorder %s21, %s24
    %p33 = scmp.eq.s32.totalorder %s16, 1
    %p34 = por %p32, %p33
    %p35 = scmp.ne.s32.totalorder %s24, %s25
    %p36 = scmp.eq.s32.totalorder %s16, 0
    %p37 = por %p35, %p36
    %p38 = scmp.ne.s32.totalorder %s24, %s25
    %p39 = scmp.eq.s32.totalorder %s17, 1
    %p40 = por %p38, %p39
    %p42 = scmp.ne.s32.totalorder %s25, %s41
    %p43 = scmp.eq.s32.totalorder %s17, 0
    %p44 = por %p42, %p43
    %s46 = sadd.s32 %s45, 1
    %p49 = scmp.eq.s32.totalorder %s11, 1
    %p50 = scmp.ne.s32.totalorder %s45, %s47
    %p51 = scmp.eq.s32.totalorder %s11, 0
    %p52 = por %p50, %p51
    %p53 = scmp.ne.s32.totalorder %s45, %s47
    %p54 = scmp.eq.s32.totalorder %s16, 1
    %p55 = por %p53, %p54
    %p56 = scmp.ne.s32.totalorder %s47, %s48
    %p57 = scmp.eq.s32.totalorder %s16, 0
    %p58 = por %p56, %p57
    %p59 = scmp.ne.s32.totalorder %s47, %s48
    %p60 = scmp.eq.s32.totalorder %s17, 1
    %p61 = por %p59, %p60
    %p63 = scmp.ne.s32.totalorder %s48, %s62
    %p64 = scmp.eq.s32.totalorder %s17, 0
    %p65 = por %p63, %p64
    %s67 = sadd.s32 %s66, 1
    %p70 = scmp.eq.s32.totalorder %s11, 1
    %p71 = scmp.ne.s32.totalorder %s66, %s68
    %p72 = scmp.eq.s32.totalorder %s11, 0
    %p73 = por %p71, %p72
    %p74 = scmp.ne.s32.totalorder %s66, %s68
    %p75 = scmp.eq.s32.totalorder %s16, 1
    %p76 = por %p74, %p75
    %p77 = scmp.ne.s32.totalorder %s68, %s69
    %p78 = scmp.eq.s32.totalorder %s16, 0
    %p79 = por %p77, %p78
    %p80 = scmp.ne.s32.totalorder %s68, %s69
    %p81 = scmp.eq.s32.totalorder %s17, 1
    %p82 = por %p80, %p81
    %p84 = scmp.ne.s32.totalorder %s69, %s83
    %p85 = scmp.eq.s32.totalorder %s17, 0
    %p86 = por %p84, %p85
    %s88 = sadd.s32 %s87, 1
    %p91 = scmp.eq.s32.totalorder %s11, 1
    %p92 = scmp.ne.s32.totalorder %s87, %s89
    %p93 = scmp.eq.s32.totalorder %s11, 0
    %p94 = por %p92, %p93
    %p95 = scmp.ne.s32.totalorder %s87, %s89
    %p96 = scmp.eq.s32.totalorder %s16, 1
    %p97 = por %p95, %p96
    %p98 = scmp.ne.s32.totalorder %s89, %s90
    %p99 = scmp.eq.s32.totalorder %s16, 0
    %p100 = por %p98, %p99
    %p101 = scmp.ne.s32.totalorder %s89, %s90
    %p102 = scmp.eq.s32.totalorder %s17, 1
    %p103 = por %p101, %p102
    %p105 = scmp.ne.s32.totalorder %s90, %s104
    %p106 = scmp.eq.s32.totalorder %s17, 0
    %p107 = por %p105, %p106
    %s109 = sadd.s32 %s108, 1
    %p112 = scmp.eq.s32.totalorder %s11, 1
    %p113 = scmp.ne.s32.totalorder %s108, %s110
    %p114 = scmp.eq.s32.totalorder %s11, 0
    %p115 = por %p113, %p114
    %p116 = scmp.ne.s32.totalorder %s108, %s110
    %p117 = scmp.eq.s32.totalorder %s16, 1
    %p118 = por %p116, %p117
    %p119 = scmp.ne.s32.totalorder %s110, %s111
    %p120 = scmp.eq.s32.totalorder %s16, 0
    %p121 = por %p119, %p120
    %p122 = scmp.ne.s32.totalorder %s110, %s111
    %p123 = scmp.eq.s32.totalorder %s17, 1
    %p124 = por %p122, %p123
    %p126 = scmp.ne.s32.totalorder %s111, %s125
    %p127 = scmp.eq.s32.totalorder %s17, 0
    %p128 = por %p126, %p127
    %s129 = ssub.s32 %s11, %s18
    %p130 = scmp.eq.s32.totalorder %s129, 0
    %s132 = sadd.s32 %s131, 1
    %s133 = scalar_select %p130, %s131, %s132
    %p136 = pneg %p130
    %p137 = scmp.eq.s32.totalorder %s11, 1
    %p138 = por %p136, %p137
    %p139 = scmp.ne.s32.totalorder %s131, %s134
    %p140 = scmp.eq.s32.totalorder %s11, 0
    %p141 = por %p139, %p140
    %p142 = scmp.ne.s32.totalorder %s131, %s134
    %p143 = scmp.eq.s32.totalorder %s16, 1
    %p144 = por %p142, %p143
    %p145 = scmp.ne.s32.totalorder %s134, %s135
    %p146 = scmp.eq.s32.totalorder %s16, 0
    %p147 = por %p145, %p146
    %p148 = scmp.ne.s32.totalorder %s134, %s135
    %p149 = scmp.eq.s32.totalorder %s17, 1
    %p150 = por %p148, %p149
    %p152 = scmp.ne.s32.totalorder %s135, %s151
    %p153 = scmp.eq.s32.totalorder %s17, 0
    %p154 = por %p152, %p153
    %p155 = scmp.le.s32.totalorder 1, %s11
    %p156 = scmp.lt.s32.totalorder %s11, 3
    %p157 = pnand %p155, %p156
    %p158 = pneg %p157
    // Predicated region
    $region9: #{dense2d_basic_block_v.1} parent=5 // pred_check
      _
    $region10: #{dense2d_basic_block_v.1} parent=5 // pred_check_branch
      %160 = sbr.rel (%p157) target = $region12
    $region11: #{dense2d_basic_block_v.1} parent=5 // pred_region
      %s161 = ssub.s32 %s11, 1
      // Predicated region
      $region13: #{dense2d_basic_block_v.1} parent=11 // pred_check
        %p162 = pneg %p58
      $region14: #{dense2d_basic_block_v.1} parent=11 // pred_check_branch
        %164 = sbr.rel (%p162) target = $region16
      $region15: #{dense2d_basic_block_v.1} parent=11 // pred_region
        _
      $region16: #{dense2d_basic_block_v.1} parent=11 // pred_fallthru
        _
      // Predicated region
      $region17: #{dense2d_basic_block_v.1} parent=11 // pred_check
        %p165 = pneg %p79
      $region18: #{dense2d_basic_block_v.1} parent=11 // pred_check_branch
        %167 = sbr.rel (%p165) target = $region20
      $region19: #{dense2d_basic_block_v.1} parent=11 // pred_region
        _
      $region20: #{dense2d_basic_block_v.1} parent=11 // pred_fallthru
        _
      // Predicated region
      $region21: #{dense2d_basic_block_v.1} parent=11 // pred_check
        %p168 = pneg %p100
      $region22: #{dense2d_basic_block_v.1} parent=11 // pred_check_branch
        %170 = sbr.rel (%p168) target = $region24
      $region23: #{dense2d_basic_block_v.1} parent=11 // pred_region
        _
      $region24: #{dense2d_basic_block_v.1} parent=11 // pred_fallthru
        _
      // Predicated region
      $region25: #{dense2d_basic_block_v.1} parent=11 // pred_check
        %p171 = pneg %p121
      $region26: #{dense2d_basic_block_v.1} parent=11 // pred_check_branch
        %173 = sbr.rel (%p171) target = $region28
      $region27: #{dense2d_basic_block_v.1} parent=11 // pred_region
        _
      $region28: #{dense2d_basic_block_v.1} parent=11 // pred_fallthru
        _
    $region12: #{dense2d_basic_block_v.1} parent=5 // pred_fallthru
      _
    %p174 = scmp.lt.s32.totalorder %s11, 2
    // Predicated region
    $region29: #{dense2d_basic_block_v.1} parent=5 // pred_check
      %p175 = pneg %p174
    $region30: #{dense2d_basic_block_v.1} parent=5 // pred_check_branch
      %177 = sbr.rel (%p175) target = $region32
    $region31: #{dense2d_basic_block_v.1} parent=5 // pred_region
      // Predicated region
      $region33: #{dense2d_basic_block_v.1} parent=31 // pred_check
        %p178 = pneg %p31
      $region34: #{dense2d_basic_block_v.1} parent=31 // pred_check_branch
        %180 = sbr.rel (%p178) target = $region36
      $region35: #{dense2d_basic_block_v.1} parent=31 // pred_region
        %p181 = scmp.lt.s32.totalorder %s11, 1
        %s182 = scalar_select %p181, %s11, 1
        %s183 = smul.addr %s182, 3
        %s184 = smul.addr %s183, 8
        %s185 = scalar_lea.vmem %s0, %s184
      $region36: #{dense2d_basic_block_v.1} parent=31 // pred_fallthru
        _
    $region32: #{dense2d_basic_block_v.1} parent=5 // pred_fallthru
      _
    %p186 = scmp.le.s32.totalorder 1, %s11
    %p187 = scmp.lt.s32.totalorder %s11, 3
    %p188 = pnand %p186, %p187
    %p189 = pneg %p188
    // Predicated region
    $region37: #{dense2d_basic_block_v.1} parent=5 // pred_check
      _
    $region38: #{dense2d_basic_block_v.1} parent=5 // pred_check_branch
      %191 = sbr.rel (%p188) target = $region40
    $region39: #{dense2d_basic_block_v.1} parent=5 // pred_region
      %s192 = ssub.s32 %s11, 1
      %p193 = scmp.lt.s32.totalorder %s16, 1
      %s194 = scalar_select %p193, %s16, 1
      %s195 = smul.addr %s194, 3
      %s196 = smul.addr %s195, 8
      %s197 = scalar_lea.vmem %s0, %s196
      %p198 = pneg %p37
      %p199 = pneg %p34
      %p200 = pneg %p58
      %p201 = pneg %p55
      %p202 = pneg %p79
      %p203 = pneg %p76
      %p204 = pneg %p100
      %p205 = pneg %p97
      %p206 = pneg %p121
      %p207 = pneg %p118
      %p208 = pneg %p147
      %p209 = pneg %p144
      %p210 = scmp.lt.s32.totalorder %s16, 1
      %s211 = scalar_select %p210, %s16, 1
      %s212 = smul.addr %s211, 3
      %s213 = smul.addr %s212, 8
      %s214 = scalar_lea.vmem %s5, %s213
      %p215 = scmp.lt.s32.totalorder %s16, 1
      %s216 = scalar_select %p215, %s16, 1
      %s217 = smul.addr %s216, 3
      %s218 = smul.addr %s217, 8
      %s219 = scalar_lea.vmem %s0, %s218
      %p220 = scmp.lt.s32.totalorder %s16, 1
      %s221 = scalar_select %p220, %s16, 1
      %s222 = smul.addr %s221, 3
      %s223 = smul.addr %s222, 8
      %s224 = scalar_lea.vmem %s5, %s223
      %v226 = vld [vmem:[%s4] sm:$0x7]
      %v227 = vld [vmem:[%s219] sm:$0xff]
      %v228 = vld [vmem:[%s219 + $0x8] sm:$0xff]
      %v229 = vld [vmem:[%s219 + $0x10] sm:$0xff]
      %231 = vrot.lane.b32.xlu0 %v229, 19
      %v232 = vpop.permute.xlu0 %231
      %236 = vrot.lane.b32.xlu0 %v227, 19
      %v237 = vpop.permute.xlu0 %236
      %238 = vrot.lane.b32.xlu0 %v228, 19
      %v239 = vpop.permute.xlu0 %238
      %vm240 = vcmask 154624
      %v241 = vsel %vm240, %v237, %v239
      %v242 = vsel %vm240, %v239, %v232
      %v246 = vsel %vm240, %v232, %v237
      %247 = vrot.lane.b32.xlu0 %v229, 18
      %v248 = vpop.permute.xlu0 %247
      %250 = vrot.lane.b32.xlu0 %v227, 18
      %v251 = vpop.permute.xlu0 %250
      %252 = vrot.lane.b32.xlu0 %v228, 18
      %v253 = vpop.permute.xlu0 %252
      %vm254 = vcmask 146432
      %v255 = vsel %vm254, %v251, %v253
      %v256 = vsel %vm254, %v253, %v248
      %v260 = vsel %vm254, %v248, %v251
      %261 = vrot.lane.b32.xlu0 %v229, 17
      %v262 = vpop.permute.xlu0 %261
      %264 = vrot.lane.b32.xlu0 %v227, 17
      %v265 = vpop.permute.xlu0 %264
      %266 = vrot.lane.b32.xlu0 %v228, 17
      %v267 = vpop.permute.xlu0 %266
      %vm268 = vcmask 138240
      %v269 = vsel %vm268, %v265, %v267
      %v270 = vsel %vm268, %v267, %v262
      %v274 = vsel %vm268, %v262, %v265
      %275 = vrot.lane.b32.xlu0 %v229, 1
      %v276 = vpop.permute.xlu0 %275
      %278 = vrot.lane.b32.xlu0 %v227, 1
      %v279 = vpop.permute.xlu0 %278
      %280 = vrot.lane.b32.xlu0 %v228, 1
      %v281 = vpop.permute.xlu0 %280
      %vm282 = vcmask 7168
      %v283 = vsel %vm282, %v279, %v281
      %v284 = vsel %vm282, %v281, %v276
      %v288 = vsel %vm282, %v276, %v279
      %289 = vrot.lane.b32.xlu0 %v227, 127
      %v290 = vpop.permute.xlu0 %289
      %291 = vrot.lane.b32.xlu0 %v228, 127
      %v292 = vpop.permute.xlu0 %291
      %293 = vrot.lane.b32.xlu0 %v229, 127
      %v294 = vpop.permute.xlu0 %293
      %vm295 = vcmask 1039360
      %v296 = vsel %vm295, %v290, %v292
      %v297 = vsel %vm295, %v292, %v294
      %v302 = vsel %vm295, %v294, %v290
      %303 = vrot.lane.b32.xlu0 %v227, 111
      %v304 = vpop.permute.xlu0 %303
      %305 = vrot.lane.b32.xlu0 %v228, 111
      %v306 = vpop.permute.xlu0 %305
      %307 = vrot.lane.b32.xlu0 %v229, 111
      %v308 = vpop.permute.xlu0 %307
      %vm309 = vcmask 908288
      %v310 = vsel %vm309, %v304, %v306
      %v311 = vsel %vm309, %v306, %v308
      %v316 = vsel %vm309, %v308, %v304
      %317 = vrot.lane.b32.xlu0 %v227, 110
      %v318 = vpop.permute.xlu0 %317
      %319 = vrot.lane.b32.xlu0 %v228, 110
      %v320 = vpop.permute.xlu0 %319
      %321 = vrot.lane.b32.xlu0 %v229, 110
      %v322 = vpop.permute.xlu0 %321
      %vm323 = vcmask 900096
      %v324 = vsel %vm323, %v318, %v320
      %v325 = vsel %vm323, %v320, %v322
      %v330 = vsel %vm323, %v322, %v318
      %331 = vrot.lane.b32.xlu0 %v227, 109
      %v332 = vpop.permute.xlu0 %331
      %333 = vrot.lane.b32.xlu0 %v228, 109
      %v334 = vpop.permute.xlu0 %333
      %335 = vrot.lane.b32.xlu0 %v229, 109
      %v336 = vpop.permute.xlu0 %335
      %vm337 = vcmask 891904
      %v338 = vsel %vm337, %v332, %v334
      %v339 = vsel %vm337, %v334, %v336
      %v344 = vsel %vm337, %v336, %v332
      %v345 = vpack.c.bf16 %v260, %v246
      %v346 = vpack.c.bf16 %v255, %v241
      %v347 = vpack.c.bf16 %v256, %v242
      %v348 = vpack.c.bf16 %v288, %v274
      %v349 = vpack.c.bf16 %v283, %v269
      %v350 = vpack.c.bf16 %v284, %v270
      %v351 = vpack.c.bf16 %v296, %v227
      %v352 = vpack.c.bf16 %v297, %v228
      %v353 = vpack.c.bf16 %v302, %v229
      %v354 = vpack.c.bf16 %v324, %v310
      %v355 = vpack.c.bf16 %v325, %v311
      %v356 = vpack.c.bf16 %v330, %v316
      %v357 = vpack.c.bf16 %v338, %v338
      %v358 = vpack.c.bf16 %v339, %v339
      %v359 = vpack.c.bf16 %v344, %v344
      %v360 = vld [vmem:[%s1] sm:$0xf]
      %vm361 = vcmask 588800
      %v363 = vsel %vm361, %v360, 0
      %vm365 = vcmask 1043456
      %v367 = vsel %vm365, %v357, 0
      %v370 = vsel %vm365, %v358, 0
      %v373 = vsel %vm365, %v359, 0
      %375 = vmatpush.bf16.msra.mxu0 0
      %376 = vmatpush.bf16.msra.mxu0 0
      %377 = vmatpush.bf16.msra.mxu0 0
      %378 = vmatpush.bf16.msra.mxu0 %v367
      %379 = vmatpush.bf16.msra.mxu0 %v354
      %380 = vmatpush.bf16.msra.mxu0 %v351
      %381 = vmatpush.bf16.msra.mxu0 %v348
      %382 = vmatpush.bf16.msra.mxu0 %v345
      %383 = vmatmul.bf16.gmra.mxu0 %v363
      %v384 = vpop.f32.mrf.mxu0
      %v385 = vadd.f32 0.0, %v384
      %v386 = vpop.f32.mrf.mxu0
      %387 = vdwg.mxu0
      %388 = vmatpush.bf16.msra.mxu0 0
      %389 = vmatpush.bf16.msra.mxu0 0
      %390 = vmatpush.bf16.msra.mxu0 0
      %391 = vmatpush.bf16.msra.mxu0 %v370
      %392 = vmatpush.bf16.msra.mxu0 %v355
      %393 = vmatpush.bf16.msra.mxu0 %v352
      %394 = vmatpush.bf16.msra.mxu0 %v349
      %395 = vmatpush.bf16.msra.mxu0 %v346
      %396 = vmatmul.bf16.gmra.mxu0 %v363
      %v397 = vpop.f32.mrf.mxu0
      %v398 = vadd.f32 0.0, %v397
      %v399 = vpop.f32.mrf.mxu0
      %400 = vdwg.mxu0
      %401 = vmatpush.bf16.msra.mxu0 0
      %402 = vmatpush.bf16.msra.mxu0 0
      %403 = vmatpush.bf16.msra.mxu0 0
      %404 = vmatpush.bf16.msra.mxu0 %v373
      %405 = vmatpush.bf16.msra.mxu0 %v356
      %406 = vmatpush.bf16.msra.mxu0 %v353
      %407 = vmatpush.bf16.msra.mxu0 %v350
      %408 = vmatpush.bf16.msra.mxu0 %v347
      %409 = vmatmul.bf16.gmra.mxu0 %v363
      %v410 = vpop.f32.mrf.mxu0
      %v411 = vadd.f32 0.0, %v410
      %v412 = vpop.f32.mrf.mxu0
      %413 = vdwg.mxu0
      %v414 = vld [vmem:[%s2] sm:$0xff]
      %416 = vset.pattern.permute.xlu0 0
      %417 = vperm.xlu0 %416, %v414
      %v418 = vpop.permute.xlu0 %417
      %v420 = vmul.f32 %v385, %v418
      %v421 = vmul.f32 %v398, %v418
      %v422 = vmul.f32 %v411, %v418
      %v423 = vld [vmem:[%s3] sm:$0xff]
      %425 = vset.pattern.permute.xlu0 0
      %426 = vperm.xlu0 %425, %v423
      %v427 = vpop.permute.xlu0 %426
      %v429 = vadd.f32 %v420, %v427
      %v430 = vadd.f32 %v421, %v427
      %v431 = vadd.f32 %v422, %v427
      %v432 = vmax.f32 %v429, 0.0
      %v433 = vmax.f32 %v430, 0.0
      %v434 = vmax.f32 %v431, 0.0
      %v436 = vperm.slane %v226, 0
      %v437 = vperm.slane %v226, 1
      %v438 = vperm.slane %v226, 2
      %v442 = vmul.f32 %v432, %v436
      %v443 = vmul.f32 %v433, %v437
      %v444 = vmul.f32 %v434, %v438
      %446 = vrot.lane.b32.xlu0 %v444, 19
      %v447 = vpop.permute.xlu0 %446
      %451 = vrot.lane.b32.xlu0 %v442, 19
      %v452 = vpop.permute.xlu0 %451
      %453 = vrot.lane.b32.xlu0 %v443, 19
      %v454 = vpop.permute.xlu0 %453
      %v455 = vsel %vm240, %v452, %v454
      %v456 = vsel %vm240, %v454, %v447
      %v460 = vsel %vm240, %v447, %v452
      %461 = vrot.lane.b32.xlu0 %v444, 18
      %v462 = vpop.permute.xlu0 %461
      %464 = vrot.lane.b32.xlu0 %v442, 18
      %v465 = vpop.permute.xlu0 %464
      %466 = vrot.lane.b32.xlu0 %v443, 18
      %v467 = vpop.permute.xlu0 %466
      %v468 = vsel %vm254, %v465, %v467
      %v469 = vsel %vm254, %v467, %v462
      %v473 = vsel %vm254, %v462, %v465
      %474 = vrot.lane.b32.xlu0 %v444, 17
      %v475 = vpop.permute.xlu0 %474
      %477 = vrot.lane.b32.xlu0 %v442, 17
      %v478 = vpop.permute.xlu0 %477
      %479 = vrot.lane.b32.xlu0 %v443, 17
      %v480 = vpop.permute.xlu0 %479
      %v481 = vsel %vm268, %v478, %v480
      %v482 = vsel %vm268, %v480, %v475
      %v486 = vsel %vm268, %v475, %v478
      %487 = vrot.lane.b32.xlu0 %v444, 1
      %v488 = vpop.permute.xlu0 %487
      %490 = vrot.lane.b32.xlu0 %v442, 1
      %v491 = vpop.permute.xlu0 %490
      %492 = vrot.lane.b32.xlu0 %v443, 1
      %v493 = vpop.permute.xlu0 %492
      %v494 = vsel %vm282, %v491, %v493
      %v495 = vsel %vm282, %v493, %v488
      %v499 = vsel %vm282, %v488, %v491
      %500 = vrot.lane.b32.xlu0 %v442, 127
      %v501 = vpop.permute.xlu0 %500
      %502 = vrot.lane.b32.xlu0 %v443, 127
      %v503 = vpop.permute.xlu0 %502
      %504 = vrot.lane.b32.xlu0 %v444, 127
      %v505 = vpop.permute.xlu0 %504
      %v506 = vsel %vm295, %v501, %v503
      %v507 = vsel %vm295, %v503, %v505
      %v512 = vsel %vm295, %v505, %v501
      %513 = vrot.lane.b32.xlu0 %v442, 111
      %v514 = vpop.permute.xlu0 %513
      %515 = vrot.lane.b32.xlu0 %v443, 111
      %v516 = vpop.permute.xlu0 %515
      %517 = vrot.lane.b32.xlu0 %v444, 111
      %v518 = vpop.permute.xlu0 %517
      %v519 = vsel %vm309, %v514, %v516
      %v520 = vsel %vm309, %v516, %v518
      %v525 = vsel %vm309, %v518, %v514
      %526 = vrot.lane.b32.xlu0 %v442, 110
      %v527 = vpop.permute.xlu0 %526
      %528 = vrot.lane.b32.xlu0 %v443, 110
      %v529 = vpop.permute.xlu0 %528
      %530 = vrot.lane.b32.xlu0 %v444, 110
      %v531 = vpop.permute.xlu0 %530
      %v532 = vsel %vm323, %v527, %v529
      %v533 = vsel %vm323, %v529, %v531
      %v538 = vsel %vm323, %v531, %v527
      %539 = vrot.lane.b32.xlu0 %v442, 109
      %v540 = vpop.permute.xlu0 %539
      %541 = vrot.lane.b32.xlu0 %v443, 109
      %v542 = vpop.permute.xlu0 %541
      %543 = vrot.lane.b32.xlu0 %v444, 109
      %v544 = vpop.permute.xlu0 %543
      %v545 = vsel %vm337, %v540, %v542
      %v546 = vsel %vm337, %v542, %v544
      %v551 = vsel %vm337, %v544, %v540
      %v552 = vpack.c.bf16 %v473, %v460
      %v553 = vpack.c.bf16 %v468, %v455
      %v554 = vpack.c.bf16 %v469, %v456
      %v555 = vpack.c.bf16 %v499, %v486
      %v556 = vpack.c.bf16 %v494, %v481
      %v557 = vpack.c.bf16 %v495, %v482
      %v558 = vpack.c.bf16 %v506, %v442
      %v559 = vpack.c.bf16 %v507, %v443
      %v560 = vpack.c.bf16 %v512, %v444
      %v561 = vpack.c.bf16 %v532, %v519
      %v562 = vpack.c.bf16 %v533, %v520
      %v563 = vpack.c.bf16 %v538, %v525
      %v564 = vpack.c.bf16 %v545, %v545
      %v565 = vpack.c.bf16 %v546, %v546
      %v566 = vpack.c.bf16 %v551, %v551
      %s567 = scalar_lea.vmem %s1, 4
      %v568 = vld [vmem:[%s567] sm:$0xf]
      %v570 = vsel %vm361, %v568, 0
      %v573 = vsel %vm365, %v564, 0
      %v576 = vsel %vm365, %v565, 0
      %v579 = vsel %vm365, %v566, 0
      %581 = vmatpush.bf16.msra.mxu0 0
      %582 = vmatpush.bf16.msra.mxu0 0
      %583 = vmatpush.bf16.msra.mxu0 0
      %584 = vmatpush.bf16.msra.mxu0 %v573
      %585 = vmatpush.bf16.msra.mxu0 %v561
      %586 = vmatpush.bf16.msra.mxu0 %v558
      %587 = vmatpush.bf16.msra.mxu0 %v555
      %588 = vmatpush.bf16.msra.mxu0 %v552
      %589 = vmatmul.bf16.gmra.mxu0 %v570
      %v590 = vpop.f32.mrf.mxu0
      %v591 = vadd.f32 0.0, %v590
      %v592 = vpop.f32.mrf.mxu0
      %593 = vdwg.mxu0
      %594 = vmatpush.bf16.msra.mxu0 0
      %595 = vmatpush.bf16.msra.mxu0 0
      %596 = vmatpush.bf16.msra.mxu0 0
      %597 = vmatpush.bf16.msra.mxu0 %v576
      %598 = vmatpush.bf16.msra.mxu0 %v562
      %599 = vmatpush.bf16.msra.mxu0 %v559
      %600 = vmatpush.bf16.msra.mxu0 %v556
      %601 = vmatpush.bf16.msra.mxu0 %v553
      %602 = vmatmul.bf16.gmra.mxu0 %v570
      %v603 = vpop.f32.mrf.mxu0
      %v604 = vadd.f32 0.0, %v603
      %v605 = vpop.f32.mrf.mxu0
      %606 = vdwg.mxu0
      %607 = vmatpush.bf16.msra.mxu0 0
      %608 = vmatpush.bf16.msra.mxu0 0
      %609 = vmatpush.bf16.msra.mxu0 0
      %610 = vmatpush.bf16.msra.mxu0 %v579
      %611 = vmatpush.bf16.msra.mxu0 %v563
      %612 = vmatpush.bf16.msra.mxu0 %v560
      %613 = vmatpush.bf16.msra.mxu0 %v557
      %614 = vmatpush.bf16.msra.mxu0 %v554
      %615 = vmatmul.bf16.gmra.mxu0 %v570
      %v616 = vpop.f32.mrf.mxu0
      %v617 = vadd.f32 0.0, %v616
      %v618 = vpop.f32.mrf.mxu0
      %619 = vdwg.mxu0
      %s620 = scalar_lea.vmem %s2, 8
      %v621 = vld [vmem:[%s620] sm:$0xff]
      %623 = vset.pattern.permute.xlu0 0
      %624 = vperm.xlu0 %623, %v621
      %v625 = vpop.permute.xlu0 %624
      %v627 = vmul.f32 %v591, %v625
      %v628 = vmul.f32 %v604, %v625
      %v629 = vmul.f32 %v617, %v625
      %s630 = scalar_lea.vmem %s3, 8
      %v631 = vld [vmem:[%s630] sm:$0xff]
      %633 = vset.pattern.permute.xlu0 0
      %634 = vperm.xlu0 %633, %v631
      %v635 = vpop.permute.xlu0 %634
      %v637 = vadd.f32 %v627, %v635
      %v638 = vadd.f32 %v628, %v635
      %v639 = vadd.f32 %v629, %v635
      %v640 = vmax.f32 %v637, 0.0
      %v641 = vmax.f32 %v638, 0.0
      %v642 = vmax.f32 %v639, 0.0
      %v643 = vmul.f32 %v640, %v436
      %v644 = vmul.f32 %v641, %v437
      %v645 = vmul.f32 %v642, %v438
      %647 = vrot.lane.b32.xlu0 %v645, 19
      %v648 = vpop.permute.xlu0 %647
      %652 = vrot.lane.b32.xlu0 %v643, 19
      %v653 = vpop.permute.xlu0 %652
      %654 = vrot.lane.b32.xlu0 %v644, 19
      %v655 = vpop.permute.xlu0 %654
      %v656 = vsel %vm240, %v653, %v655
      %v657 = vsel %vm240, %v655, %v648
      %v661 = vsel %vm240, %v648, %v653
      %662 = vrot.lane.b32.xlu0 %v645, 18
      %v663 = vpop.permute.xlu0 %662
      %665 = vrot.lane.b32.xlu0 %v643, 18
      %v666 = vpop.permute.xlu0 %665
      %667 = vrot.lane.b32.xlu0 %v644, 18
      %v668 = vpop.permute.xlu0 %667
      %v669 = vsel %vm254, %v666, %v668
      %v670 = vsel %vm254, %v668, %v663
      %v674 = vsel %vm254, %v663, %v666
      %675 = vrot.lane.b32.xlu0 %v645, 17
      %v676 = vpop.permute.xlu0 %675
      %678 = vrot.lane.b32.xlu0 %v643, 17
      %v679 = vpop.permute.xlu0 %678
      %680 = vrot.lane.b32.xlu0 %v644, 17
      %v681 = vpop.permute.xlu0 %680
      %v682 = vsel %vm268, %v679, %v681
      %v683 = vsel %vm268, %v681, %v676
      %v687 = vsel %vm268, %v676, %v679
      %688 = vrot.lane.b32.xlu0 %v645, 1
      %v689 = vpop.permute.xlu0 %688
      %691 = vrot.lane.b32.xlu0 %v643, 1
      %v692 = vpop.permute.xlu0 %691
      %693 = vrot.lane.b32.xlu0 %v644, 1
      %v694 = vpop.permute.xlu0 %693
      %v695 = vsel %vm282, %v692, %v694
      %v696 = vsel %vm282, %v694, %v689
      %v700 = vsel %vm282, %v689, %v692
      %701 = vrot.lane.b32.xlu0 %v643, 127
      %v702 = vpop.permute.xlu0 %701
      %703 = vrot.lane.b32.xlu0 %v644, 127
      %v704 = vpop.permute.xlu0 %703
      %705 = vrot.lane.b32.xlu0 %v645, 127
      %v706 = vpop.permute.xlu0 %705
      %v707 = vsel %vm295, %v702, %v704
      %v708 = vsel %vm295, %v704, %v706
      %v713 = vsel %vm295, %v706, %v702
      %714 = vrot.lane.b32.xlu0 %v643, 111
      %v715 = vpop.permute.xlu0 %714
      %716 = vrot.lane.b32.xlu0 %v644, 111
      %v717 = vpop.permute.xlu0 %716
      %718 = vrot.lane.b32.xlu0 %v645, 111
      %v719 = vpop.permute.xlu0 %718
      %v720 = vsel %vm309, %v715, %v717
      %v721 = vsel %vm309, %v717, %v719
      %v726 = vsel %vm309, %v719, %v715
      %727 = vrot.lane.b32.xlu0 %v643, 110
      %v728 = vpop.permute.xlu0 %727
      %729 = vrot.lane.b32.xlu0 %v644, 110
      %v730 = vpop.permute.xlu0 %729
      %731 = vrot.lane.b32.xlu0 %v645, 110
      %v732 = vpop.permute.xlu0 %731
      %v733 = vsel %vm323, %v728, %v730
      %v734 = vsel %vm323, %v730, %v732
      %v739 = vsel %vm323, %v732, %v728
      %740 = vrot.lane.b32.xlu0 %v643, 109
      %v741 = vpop.permute.xlu0 %740
      %742 = vrot.lane.b32.xlu0 %v644, 109
      %v743 = vpop.permute.xlu0 %742
      %744 = vrot.lane.b32.xlu0 %v645, 109
      %v745 = vpop.permute.xlu0 %744
      %v746 = vsel %vm337, %v741, %v743
      %v747 = vsel %vm337, %v743, %v745
      %v752 = vsel %vm337, %v745, %v741
      %v753 = vpack.c.bf16 %v674, %v661
      %v754 = vpack.c.bf16 %v669, %v656
      %v755 = vpack.c.bf16 %v670, %v657
      %v756 = vpack.c.bf16 %v700, %v687
      %v757 = vpack.c.bf16 %v695, %v682
      %v758 = vpack.c.bf16 %v696, %v683
      %v759 = vpack.c.bf16 %v707, %v643
      %v760 = vpack.c.bf16 %v708, %v644
      %v761 = vpack.c.bf16 %v713, %v645
      %v762 = vpack.c.bf16 %v733, %v720
      %v763 = vpack.c.bf16 %v734, %v721
      %v764 = vpack.c.bf16 %v739, %v726
      %v765 = vpack.c.bf16 %v746, %v746
      %v766 = vpack.c.bf16 %v747, %v747
      %v767 = vpack.c.bf16 %v752, %v752
      %s768 = scalar_lea.vmem %s1, 8
      %v769 = vld [vmem:[%s768] sm:$0xf]
      %v771 = vsel %vm361, %v769, 0
      %v774 = vsel %vm365, %v765, 0
      %v777 = vsel %vm365, %v766, 0
      %v780 = vsel %vm365, %v767, 0
      %782 = vmatpush.bf16.msra.mxu0 0
      %783 = vmatpush.bf16.msra.mxu0 0
      %784 = vmatpush.bf16.msra.mxu0 0
      %785 = vmatpush.bf16.msra.mxu0 %v774
      %786 = vmatpush.bf16.msra.mxu0 %v762
      %787 = vmatpush.bf16.msra.mxu0 %v759
      %788 = vmatpush.bf16.msra.mxu0 %v756
      %789 = vmatpush.bf16.msra.mxu0 %v753
      %790 = vmatmul.bf16.gmra.mxu0 %v771
      %v791 = vpop.f32.mrf.mxu0
      %v792 = vadd.f32 0.0, %v791
      %v793 = vpop.f32.mrf.mxu0
      %794 = vdwg.mxu0
      %795 = vmatpush.bf16.msra.mxu0 0
      %796 = vmatpush.bf16.msra.mxu0 0
      %797 = vmatpush.bf16.msra.mxu0 0
      %798 = vmatpush.bf16.msra.mxu0 %v777
      %799 = vmatpush.bf16.msra.mxu0 %v763
      %800 = vmatpush.bf16.msra.mxu0 %v760
      %801 = vmatpush.bf16.msra.mxu0 %v757
      %802 = vmatpush.bf16.msra.mxu0 %v754
      %803 = vmatmul.bf16.gmra.mxu0 %v771
      %v804 = vpop.f32.mrf.mxu0
      %v805 = vadd.f32 0.0, %v804
      %v806 = vpop.f32.mrf.mxu0
      %807 = vdwg.mxu0
      %808 = vmatpush.bf16.msra.mxu0 0
      %809 = vmatpush.bf16.msra.mxu0 0
      %810 = vmatpush.bf16.msra.mxu0 0
      %811 = vmatpush.bf16.msra.mxu0 %v780
      %812 = vmatpush.bf16.msra.mxu0 %v764
      %813 = vmatpush.bf16.msra.mxu0 %v761
      %814 = vmatpush.bf16.msra.mxu0 %v758
      %815 = vmatpush.bf16.msra.mxu0 %v755
      %816 = vmatmul.bf16.gmra.mxu0 %v771
      %v817 = vpop.f32.mrf.mxu0
      %v818 = vadd.f32 0.0, %v817
      %v819 = vpop.f32.mrf.mxu0
      %820 = vdwg.mxu0
      %s821 = scalar_lea.vmem %s2, 16
      %v822 = vld [vmem:[%s821] sm:$0xff]
      %824 = vset.pattern.permute.xlu0 0
      %825 = vperm.xlu0 %824, %v822
      %v826 = vpop.permute.xlu0 %825
      %v828 = vmul.f32 %v792, %v826
      %v829 = vmul.f32 %v805, %v826
      %v830 = vmul.f32 %v818, %v826
      %s831 = scalar_lea.vmem %s3, 16
      %v832 = vld [vmem:[%s831] sm:$0xff]
      %834 = vset.pattern.permute.xlu0 0
      %835 = vperm.xlu0 %834, %v832
      %v836 = vpop.permute.xlu0 %835
      %v838 = vadd.f32 %v828, %v836
      %v839 = vadd.f32 %v829, %v836
      %v840 = vadd.f32 %v830, %v836
      %v841 = vadd.f32 %v838, %v442
      %v842 = vadd.f32 %v839, %v443
      %v843 = vadd.f32 %v840, %v444
      %v844 = vmax.f32 %v841, 0.0
      %v845 = vmax.f32 %v842, 0.0
      %v846 = vmax.f32 %v843, 0.0
      %847 = vst [vmem:[%s224] sm:$0xff] %v844
      %848 = vst [vmem:[%s224 + $0x8] sm:$0xff] %v845
      %849 = vst [vmem:[%s224 + $0x10] sm:$0xff] %v846
      %p850 = scmp.lt.s32.totalorder %s16, 1
      %s851 = scalar_select %p850, %s16, 1
      %s852 = smul.addr %s851, 3
      %s853 = smul.addr %s852, 8
      %s854 = scalar_lea.vmem %s5, %s853
      // Predicated region
      $region41: #{dense2d_basic_block_v.1} parent=39 // pred_check
        %p855 = pneg %p144
      $region42: #{dense2d_basic_block_v.1} parent=39 // pred_check_branch
        %857 = sbr.rel (%p855) target = $region44
      $region43: #{dense2d_basic_block_v.1} parent=39 // pred_region
        _
      $region44: #{dense2d_basic_block_v.1} parent=39 // pred_fallthru
        _
    $region40: #{dense2d_basic_block_v.1} parent=5 // pred_fallthru
      _
    %p858 = scmp.le.s32.totalorder 2, %s11
    // Predicated region
    $region45: #{dense2d_basic_block_v.1} parent=5 // pred_check
      %p859 = pneg %p858
    $region46: #{dense2d_basic_block_v.1} parent=5 // pred_check_branch
      %861 = sbr.rel (%p859) target = $region48
    $region47: #{dense2d_basic_block_v.1} parent=5 // pred_region
      %s862 = ssub.s32 %s11, 2
      // Predicated region
      $region49: #{dense2d_basic_block_v.1} parent=47 // pred_check
        %p863 = pneg %p150
      $region50: #{dense2d_basic_block_v.1} parent=47 // pred_check_branch
        %865 = sbr.rel (%p863) target = $region52
      $region51: #{dense2d_basic_block_v.1} parent=47 // pred_region
        %p866 = scmp.lt.s32.totalorder %s17, 1
        %s867 = scalar_select %p866, %s17, 1
        %s868 = smul.addr %s867, 3
        %s869 = smul.addr %s868, 8
        %s870 = scalar_lea.vmem %s5, %s869
      $region52: #{dense2d_basic_block_v.1} parent=47 // pred_fallthru
        _
    $region48: #{dense2d_basic_block_v.1} parent=5 // pred_fallthru
      _
  $region6: #{dense2d_basic_block_v.1} parent=0 // loop_footer
    %s15 = sadd.s32 1, %s11
  $region7: #{dense2d_basic_block_v.1} parent=0 // loop_footer_branch
    %10 = sbr.rel target = $region3
  $region8: #{dense2d_basic_block_v.1} parent=0 // loop_exit
    _

</llo_original>
